<compile_context>
chip_gen: v7x
topology: tpu7x:2x2x1
jax: 0.10.0
libtpu: 0.0.40
codegen_flags: <defaults>
</compile_context>

<pallas_src>
import functools

import jax
import jax.numpy as jnp
from jax.experimental import pallas as pl
from jax.experimental.pallas import tpu as pltpu

_LANE = 128        # lane tile (last dim)
_SUBLANE = 16      # batch tile granularity (legal for both f32 (8) and bf16 (16))
_MAX_BLOCK_M = 512


def _round_up(n, m):
    return ((n + m - 1) // m) * m


def _vmem_budget_bytes():
    """Per-generation VMEM budget with headroom for compiler scratch."""
    try:
        cap = int(pltpu.get_tpu_info().vmem_capacity_bytes)
    except Exception:
        cap = 64 * 1024 * 1024   # conservative fallback (v7x per-TC VMEM)
    return (cap * 7) // 8        # ~12.5% headroom


def _mlp_segment_kernel(*refs, n_layers, final_relu):
    # refs = (x_ref, w0, b0, w1, b1, ..., w_{n-1}, b_{n-1}, o_ref)
    x_ref = refs[0]
    o_ref = refs[-1]
    h = x_ref[...].astype(jnp.float32)
    for i in range(n_layers):
        w = refs[1 + 2 * i][...]          # (p_in, p_out) bf16, resident in VMEM
        b = refs[2 + 2 * i][...]          # (1, p_out) f32 -> broadcasts over batch
        h = jnp.dot(h.astype(jnp.bfloat16), w,
                    preferred_element_type=jnp.float32) + b
        if i < n_layers - 1 or final_relu:
            h = jnp.maximum(h, 0.0)        # ReLU between all but the global last layer
    o_ref[...] = h.astype(o_ref.dtype)


def pad_params(params):
    """Pad params once (outside the per-call path): weights -> bf16 lane-dense blocks.

    params: sequence of (w, b) with w (in_f, out_f) pre-transposed from PyTorch's
            (out_f, in_f), b (out_f,).
    Returns (padded_params, feat) where feat are the true layer sizes.
    """
    feat = [params[0][0].shape[0]] + [w.shape[1] for (w, _) in params]
    pfeat = [_round_up(d, _LANE) for d in feat]
    padded = []
    for li, (w, b) in enumerate(params):
        w_p = jnp.zeros((pfeat[li], pfeat[li + 1]), jnp.bfloat16)
        w_p = w_p.at[: w.shape[0], : w.shape[1]].set(w.astype(jnp.bfloat16))
        b_p = jnp.zeros((1, pfeat[li + 1]), jnp.float32)
        b_p = b_p.at[0, : b.shape[0]].set(b.astype(jnp.float32))
        padded.append((w_p, b_p))
    return tuple(padded), feat


def custom_mlp_forward(x, padded_params, *, out_features):
    """Fused forward pass matching PyTorch CustomMLP.forward.

    x: (B, in_f) float32.  padded_params: output of pad_params().
    """
    B, in_f = x.shape
    n_layers = len(padded_params)
    pfeat = [padded_params[0][0].shape[0]] + [w.shape[1] for (w, _) in padded_params]
    max_f = max(pfeat)

    budget = _vmem_budget_bytes()

    # ---- group consecutive layers so resident (single-buffered) weights fit VMEM ----
    def _w_bytes(li):
        return pfeat[li] * pfeat[li + 1] * 2 + 8 * pfeat[li + 1] * 4  # bf16 W + padded f32 b

    min_act = _SUBLANE * 4 * 7 * max_f   # activation reserve at the smallest batch tile
    segments, cur, cur_b = [], [], 0
    for li in range(n_layers):
        wb = _w_bytes(li)
        if cur and cur_b + wb > budget - min_act:
            segments.append(cur)
            cur, cur_b = [], 0
        cur.append(li)
        cur_b += wb
    segments.append(cur)
    # TODO(synk): if a SINGLE layer's weights alone exceed the VMEM budget we would
    # additionally need to tile that matmul over its output features (extra grid axis).

    max_seg_w = max(sum(_w_bytes(li) for li in seg) for seg in segments)

    # ---- batch tiling: >=2 tiles when B permits (shards over v7x's 2 TCs via the
    # "parallel" axis), as large as the VMEM budget allows (fewer grid steps). ----
    if B <= _SUBLANE:
        block_m = _SUBLANE
    else:
        block_m = min(_MAX_BLOCK_M, _round_up(pl.cdiv(B, 2), _SUBLANE))
        while block_m > _SUBLANE:
            act_bytes = block_m * 4 * 7 * max_f   # in/out double-buffers + intermediates
            if max_seg_w + act_bytes <= budget:
                break
            block_m = max(_SUBLANE, _round_up(block_m // 2, _SUBLANE))
    b_pad = _round_up(B, block_m)
    grid = (b_pad // block_m,)

    # Pad the input only when needed (skip the extra HBM pass in the aligned case).
    if b_pad == B and pfeat[0] == in_f:
        h = x
    else:
        h = jnp.zeros((b_pad, pfeat[0]), x.dtype).at[:B, :in_f].set(x)

    for si, seg in enumerate(segments):
        seg_n = len(seg)
        final_relu = si < len(segments) - 1   # ReLU after segment unless it's the last layer
        f_in, f_out = pfeat[seg[0]], pfeat[seg[-1] + 1]

        in_specs = [pl.BlockSpec((block_m, f_in), lambda i: (i, 0))]
        operands = [h]
        flops = 0
        bytes_accessed = b_pad * f_in * 4 + b_pad * f_out * 4
        for li in seg:
            w_p, b_p = padded_params[li]
            in_specs.append(pl.BlockSpec(w_p.shape, lambda i: (0, 0),
                                         pipeline_mode=pl.Buffered(1)))
            in_specs.append(pl.BlockSpec(b_p.shape, lambda i: (0, 0),
                                         pipeline_mode=pl.Buffered(1)))
            operands += [w_p, b_p]
            flops += 2 * b_pad * w_p.shape[0] * w_p.shape[1]
            bytes_accessed += w_p.size * 2 + b_p.size * 4

        kernel = functools.partial(_mlp_segment_kernel,
                                   n_layers=seg_n, final_relu=final_relu)
        h = pl.pallas_call(
            kernel,
            out_shape=jax.ShapeDtypeStruct((b_pad, f_out), jnp.float32),
            grid=grid,
            in_specs=in_specs,
            out_specs=pl.BlockSpec((block_m, f_out), lambda i: (i, 0)),
            compiler_params=pltpu.CompilerParams(
                dimension_semantics=("parallel",),
                vmem_limit_bytes=budget,
            ),
            cost_estimate=pl.CostEstimate(
                flops=flops, transcendentals=0, bytes_accessed=bytes_accessed),
        )(*operands)

    if b_pad == B and pfeat[-1] == out_features:
        return h
    return h[:B, :out_features]


def init_mlp_params(key, layer_sizes):
    """nn.Linear-style init: U(-1/sqrt(in_f), 1/sqrt(in_f)); weights stored (in_f, out_f)."""
    params = []
    for in_f, out_f in zip(layer_sizes[:-1], layer_sizes[1:]):
        key, kw, kb = jax.random.split(key, 3)
        bound = 1.0 / jnp.sqrt(jnp.float32(in_f))
        w = jax.random.uniform(kw, (in_f, out_f), jnp.float32, -bound, bound)
        b = jax.random.uniform(kb, (out_f,), jnp.float32, -bound, bound)
        params.append((w, b))
    return params


def _reference_forward(x, params):
    # Pure-JAX f32 reference for correctness checking.
    n = len(params)
    for i, (w, b) in enumerate(params):
        x = x @ w + b
        if i < n - 1:
            x = jnp.maximum(x, 0.0)
    return x


# TODO(synk): train_model / evaluate_model / save_model / load_model are host-side
# training & I/O utilities (optimizer loop, MSELoss, torch.save) — not part of the
# forward pass and not translated to Pallas.

if __name__ == "__main__":
    layer_sizes = [32, 64, 48, 16]
    batch = 24   # small, non-aligned batch: exercises padding and a 2-tile grid

    key = jax.random.PRNGKey(0)
    key, kx = jax.random.split(key)
    x = jax.random.normal(kx, (batch, layer_sizes[0]), jnp.float32)

    params = tuple(init_mlp_params(jax.random.PRNGKey(0), layer_sizes))

    # Pad / bf16-convert parameters ONCE (outside the jitted per-call path).
    padded_params, feat = pad_params(params)

    forward = jax.jit(functools.partial(custom_mlp_forward, out_features=feat[-1]))
    out = forward(x, padded_params)
    jax.block_until_ready(out)

    assert out.shape == (batch, layer_sizes[-1])
    assert out.dtype == jnp.float32

    ref = _reference_forward(x, params)
    assert jnp.allclose(out, ref, rtol=2e-2, atol=2e-2), "mismatch vs JAX reference"

    print("KERNEL_OK")
</pallas_src>

<mosaic_0001>
module attributes {stable_mosaic.version = 11 : i64} {
  func.func @_mlp_segment_kernel(%arg0: i32, %arg1: memref<16x128xf32, #tpu.memory_space<vmem>>, %arg2: memref<128x128xbf16, #tpu.memory_space<vmem>>, %arg3: memref<1x128xf32, #tpu.memory_space<vmem>>, %arg4: memref<128x128xbf16, #tpu.memory_space<vmem>>, %arg5: memref<1x128xf32, #tpu.memory_space<vmem>>, %arg6: memref<128x128xbf16, #tpu.memory_space<vmem>>, %arg7: memref<1x128xf32, #tpu.memory_space<vmem>>, %arg8: memref<16x128xf32, #tpu.memory_space<vmem>>) attributes {dimension_semantics = [#tpu.dimension_semantics<parallel>], iteration_bounds = array<i64: 2>, scalar_prefetch = 0 : i64, scratch_operands = 0 : i64, tpu.core_type = #tpu.core_type<tc>, window_params = [{transform_indices = @transform_0, window_bounds = array<i64: 16, 128>}, {pipeline_mode = #tpu.pipeline_mode<synchronous>, transform_indices = @transform_1, window_bounds = array<i64: 128, 128>}, {pipeline_mode = #tpu.pipeline_mode<synchronous>, transform_indices = @transform_2, window_bounds = array<i64: 1, 128>}, {pipeline_mode = #tpu.pipeline_mode<synchronous>, transform_indices = @transform_3, window_bounds = array<i64: 128, 128>}, {pipeline_mode = #tpu.pipeline_mode<synchronous>, transform_indices = @transform_4, window_bounds = array<i64: 1, 128>}, {pipeline_mode = #tpu.pipeline_mode<synchronous>, transform_indices = @transform_5, window_bounds = array<i64: 128, 128>}, {pipeline_mode = #tpu.pipeline_mode<synchronous>, transform_indices = @transform_6, window_bounds = array<i64: 1, 128>}, {transform_indices = @transform_7, window_bounds = array<i64: 16, 128>}]} {
    %c0 = arith.constant 0 : index
    %c0_0 = arith.constant 0 : index
    %0 = vector.load %arg1[%c0, %c0_0] : memref<16x128xf32, #tpu.memory_space<vmem>>, vector<16x128xf32>
    %c0_1 = arith.constant 0 : index
    %c0_2 = arith.constant 0 : index
    %1 = vector.load %arg2[%c0_1, %c0_2] : memref<128x128xbf16, #tpu.memory_space<vmem>>, vector<128x128xbf16>
    %c0_3 = arith.constant 0 : index
    %c0_4 = arith.constant 0 : index
    %2 = vector.load %arg3[%c0_3, %c0_4] : memref<1x128xf32, #tpu.memory_space<vmem>>, vector<1x128xf32>
    %3 = arith.truncf %0 : vector<16x128xf32> to vector<16x128xbf16>
    %cst = arith.constant dense<0.000000e+00> : vector<16x128xf32>
    %4 = tpu.matmul %3, %1, %cst {dimension_numbers = #tpu.dot_dimension_numbers<[1], [0], [0], [1], [0, 0, 1, 1], [], []>} : vector<16x128xbf16>, vector<128x128xbf16>, vector<16x128xf32> -> vector<16x128xf32>
    %5 = vector.broadcast %2 : vector<1x128xf32> to vector<16x128xf32>
    %6 = arith.addf %4, %5 : vector<16x128xf32>
    %cst_5 = arith.constant 0.000000e+00 : f32
    %7 = vector.broadcast %cst_5 : f32 to vector<16x128xf32>
    %8 = arith.maximumf %6, %7 : vector<16x128xf32>
    %c0_6 = arith.constant 0 : index
    %c0_7 = arith.constant 0 : index
    %9 = vector.load %arg4[%c0_6, %c0_7] : memref<128x128xbf16, #tpu.memory_space<vmem>>, vector<128x128xbf16>
    %c0_8 = arith.constant 0 : index
    %c0_9 = arith.constant 0 : index
    %10 = vector.load %arg5[%c0_8, %c0_9] : memref<1x128xf32, #tpu.memory_space<vmem>>, vector<1x128xf32>
    %11 = arith.truncf %8 : vector<16x128xf32> to vector<16x128xbf16>
    %cst_10 = arith.constant dense<0.000000e+00> : vector<16x128xf32>
    %12 = tpu.matmul %11, %9, %cst_10 {dimension_numbers = #tpu.dot_dimension_numbers<[1], [0], [0], [1], [0, 0, 1, 1], [], []>} : vector<16x128xbf16>, vector<128x128xbf16>, vector<16x128xf32> -> vector<16x128xf32>
    %13 = vector.broadcast %10 : vector<1x128xf32> to vector<16x128xf32>
    %14 = arith.addf %12, %13 : vector<16x128xf32>
    %cst_11 = arith.constant 0.000000e+00 : f32
    %15 = vector.broadcast %cst_11 : f32 to vector<16x128xf32>
    %16 = arith.maximumf %14, %15 : vector<16x128xf32>
    %c0_12 = arith.constant 0 : index
    %c0_13 = arith.constant 0 : index
    %17 = vector.load %arg6[%c0_12, %c0_13] : memref<128x128xbf16, #tpu.memory_space<vmem>>, vector<128x128xbf16>
    %c0_14 = arith.constant 0 : index
    %c0_15 = arith.constant 0 : index
    %18 = vector.load %arg7[%c0_14, %c0_15] : memref<1x128xf32, #tpu.memory_space<vmem>>, vector<1x128xf32>
    %19 = arith.truncf %16 : vector<16x128xf32> to vector<16x128xbf16>
    %cst_16 = arith.constant dense<0.000000e+00> : vector<16x128xf32>
    %20 = tpu.matmul %19, %17, %cst_16 {dimension_numbers = #tpu.dot_dimension_numbers<[1], [0], [0], [1], [0, 0, 1, 1], [], []>} : vector<16x128xbf16>, vector<128x128xbf16>, vector<16x128xf32> -> vector<16x128xf32>
    %21 = vector.broadcast %18 : vector<1x128xf32> to vector<16x128xf32>
    %22 = arith.addf %20, %21 : vector<16x128xf32>
    %c0_17 = arith.constant 0 : index
    %c0_18 = arith.constant 0 : index
    %23 = vector.load %arg8[%c0_17, %c0_18] : memref<16x128xf32, #tpu.memory_space<vmem>>, vector<16x128xf32>
    tpu.vector_store %arg8[%c0_17, %c0_18], %22 {strides = array<i32>} : memref<16x128xf32, #tpu.memory_space<vmem>>, vector<16x128xf32>,
    return
  }
  func.func @transform_0(%arg0: i32) -> (i32, i32) {
    %c0_i32 = arith.constant 0 : i32
    %c0_i32_0 = arith.constant 0 : i32
    return %arg0, %c0_i32 : i32, i32
  }
  func.func @transform_1(%arg0: i32) -> (i32, i32) {
    %c0_i32 = arith.constant 0 : i32
    %c0_i32_0 = arith.constant 0 : i32
    %c0_i32_1 = arith.constant 0 : i32
    return %c0_i32, %c0_i32_0 : i32, i32
  }
  func.func @transform_2(%arg0: i32) -> (i32, i32) {
    %c0_i32 = arith.constant 0 : i32
    %c0_i32_0 = arith.constant 0 : i32
    %c0_i32_1 = arith.constant 0 : i32
    return %c0_i32, %c0_i32_0 : i32, i32
  }
  func.func @transform_3(%arg0: i32) -> (i32, i32) {
    %c0_i32 = arith.constant 0 : i32
    %c0_i32_0 = arith.constant 0 : i32
    %c0_i32_1 = arith.constant 0 : i32
    return %c0_i32, %c0_i32_0 : i32, i32
  }
  func.func @transform_4(%arg0: i32) -> (i32, i32) {
    %c0_i32 = arith.constant 0 : i32
    %c0_i32_0 = arith.constant 0 : i32
    %c0_i32_1 = arith.constant 0 : i32
    return %c0_i32, %c0_i32_0 : i32, i32
  }
  func.func @transform_5(%arg0: i32) -> (i32, i32) {
    %c0_i32 = arith.constant 0 : i32
    %c0_i32_0 = arith.constant 0 : i32
    %c0_i32_1 = arith.constant 0 : i32
    return %c0_i32, %c0_i32_0 : i32, i32
  }
  func.func @transform_6(%arg0: i32) -> (i32, i32) {
    %c0_i32 = arith.constant 0 : i32
    %c0_i32_0 = arith.constant 0 : i32
    %c0_i32_1 = arith.constant 0 : i32
    return %c0_i32, %c0_i32_0 : i32, i32
  }
  func.func @transform_7(%arg0: i32) -> (i32, i32) {
    %c0_i32 = arith.constant 0 : i32
    %c0_i32_0 = arith.constant 0 : i32
    return %arg0, %c0_i32 : i32, i32
  }
}

</mosaic_0001>

<llo_original>
// kernel: custom_mlp_forward.1
$region0: #{custom_mlp_forward.1}
  #allocation0 [shape = 'u32[]', space=smem, size = 0x4, offset = 0x4, fixed_abs, tag = 'smem constant byte address 0x4 - core index']
  #allocation1 [shape = 'u32[144,128]{1,0:T(1,128)}', space=vmem, size = 0x12000, scoped, tag = 'internal scratch']
  %s0 = inlined_call_operand.vmem [shape: f32[32,128], index: 0, kind: input, shape index: {}]
  %s1 = inlined_call_operand.hbm [shape: bf16[128,128], index: 1, kind: input, shape index: {}]
  %s2 = inlined_call_operand.vmem [shape: f32[1,128], index: 2, kind: input, shape index: {}]
  %s3 = inlined_call_operand.vmem [shape: bf16[128,128], index: 3, kind: input, shape index: {}]
  %s4 = inlined_call_operand.vmem [shape: f32[1,128], index: 4, kind: input, shape index: {}]
  %s5 = inlined_call_operand.hbm [shape: bf16[128,128], index: 5, kind: input, shape index: {}]
  %s6 = inlined_call_operand.vmem [shape: f32[1,128], index: 6, kind: input, shape index: {}]
  %s7 = inlined_call_operand.vmem [shape: f32[32,128], index: 7, kind: output, shape index: {}]
  %s8 = sld [smem:[#allocation0]]
  $region69: #{custom_mlp_forward.1} parent=0
    _
  %s10 = ssub.s32 1, %s8
  %s11 = scalar_select 0, %s10, %s8
  $region1: #{custom_mlp_forward.1} parent=0
    #allocation2 [shape = 'u8[32768]{0}', space=vmem, size = 0x8000, scoped, tag = 'input window, operand 1, single buffered']
    #allocation3 [shape = 's32[2]{0}', space=sflag, size = 0x8, scoped, tag = 'scoped memory for custom_mlp_forward.1']
    #allocation4 [shape = 'u8[32768]{0}', space=vmem, size = 0x8000, scoped, tag = 'input window, operand 5, single buffered']
    #allocation5 [shape = 's32[1]{0}', space=sflag, size = 0x4, scoped, tag = 'scoped memory for custom_mlp_forward.1']
    %12 = vsyncpa [#allocation3], 0
    %13 = vsyncpa [#allocation5], 0
    loop: start=0, step=1, limit=4
    $region2: #{custom_mlp_forward.1} parent=1 // loop_pre_header
      _
    $region3: #{custom_mlp_forward.1} parent=1 // loop_header
      %s15 = sphi 0, %s19
      %p16 = scmp.ge.s32.totalorder %s15, 4
      %s25 = sphi 0, %s27
      %s28 = sphi 0, %s25
      %s29 = sphi 0, %s28
      %s45 = sphi 0, %s29
      %s49 = sphi 0, %s49
      %s51 = sphi 0, %s49
      %s52 = sphi 0, %s51
      %s66 = sphi 0, %s52
      %s70 = sphi 0, %s70
      %s72 = sphi 0, %s70
      %s73 = sphi 0, %s72
      %s87 = sphi 0, %s73
      %s91 = sphi 0, %s91
      %s93 = sphi 0, %s91
      %s94 = sphi 0, %s93
      %s108 = sphi 0, %s94
      %s112 = sphi 0, %s112
      %s114 = sphi 0, %s112
      %s115 = sphi 0, %s114
      %s129 = sphi 0, %s115
      %s133 = sphi 0, %s133
      %s135 = sphi 0, %s133
      %s136 = sphi 0, %s135
      %s150 = sphi 0, %s136
      %s154 = sphi 0, %s154
      %s156 = sphi 0, %s154
      %s157 = sphi 0, %s156
      %s171 = sphi 0, %s157
      %s177 = sphi 0, %s179
      %s180 = sphi 0, %s177
      %s181 = sphi 0, %s180
      %s197 = sphi 0, %s181
    $region4: #{custom_mlp_forward.1} parent=1 // loop_header_branch
      %18 = sbr.rel (%p16) target = $region8
    $region5: #{custom_mlp_forward.1} parent=1 // loop_body
      %s20 = ssub.s32 %s15, 1
      %s21 = ssub.s32 %s15, 2
      %s22 = sadd.s32 %s15, 1
      %s23 = ssub.s32 %s15, %s22
      %p24 = scmp.eq.s32.totalorder %s23, 0
      %s26 = sadd.s32 %s25, 1
      %s27 = scalar_select %p24, %s25, %s26
      %p30 = pneg %p24
      %p31 = scmp.eq.s32.totalorder %s15, 1
      %p32 = por %p30, %p31
      %p33 = scmp.ne.s32.totalorder %s25, %s28
      %p34 = scmp.eq.s32.totalorder %s15, 0
      %p35 = por %p33, %p34
      %p36 = scmp.ne.s32.totalorder %s25, %s28
      %p37 = scmp.eq.s32.totalorder %s20, 1
      %p38 = por %p36, %p37
      %p39 = scmp.ne.s32.totalorder %s28, %s29
      %p40 = scmp.eq.s32.totalorder %s20, 0
      %p41 = por %p39, %p40
      %p42 = scmp.ne.s32.totalorder %s28, %s29
      %p43 = scmp.eq.s32.totalorder %s21, 1
      %p44 = por %p42, %p43
      %p46 = scmp.ne.s32.totalorder %s29, %s45
      %p47 = scmp.eq.s32.totalorder %s21, 0
      %p48 = por %p46, %p47
      %s50 = sadd.s32 %s49, 1
      %p53 = scmp.eq.s32.totalorder %s15, 1
      %p54 = scmp.ne.s32.totalorder %s49, %s51
      %p55 = scmp.eq.s32.totalorder %s15, 0
      %p56 = por %p54, %p55
      %p57 = scmp.ne.s32.totalorder %s49, %s51
      %p58 = scmp.eq.s32.totalorder %s20, 1
      %p59 = por %p57, %p58
      %p60 = scmp.ne.s32.totalorder %s51, %s52
      %p61 = scmp.eq.s32.totalorder %s20, 0
      %p62 = por %p60, %p61
      %p63 = scmp.ne.s32.totalorder %s51, %s52
      %p64 = scmp.eq.s32.totalorder %s21, 1
      %p65 = por %p63, %p64
      %p67 = scmp.ne.s32.totalorder %s52, %s66
      %p68 = scmp.eq.s32.totalorder %s21, 0
      %p69 = por %p67, %p68
      %s71 = sadd.s32 %s70, 1
      %p74 = scmp.eq.s32.totalorder %s15, 1
      %p75 = scmp.ne.s32.totalorder %s70, %s72
      %p76 = scmp.eq.s32.totalorder %s15, 0
      %p77 = por %p75, %p76
      %p78 = scmp.ne.s32.totalorder %s70, %s72
      %p79 = scmp.eq.s32.totalorder %s20, 1
      %p80 = por %p78, %p79
      %p81 = scmp.ne.s32.totalorder %s72, %s73
      %p82 = scmp.eq.s32.totalorder %s20, 0
      %p83 = por %p81, %p82
      %p84 = scmp.ne.s32.totalorder %s72, %s73
      %p85 = scmp.eq.s32.totalorder %s21, 1
      %p86 = por %p84, %p85
      %p88 = scmp.ne.s32.totalorder %s73, %s87
      %p89 = scmp.eq.s32.totalorder %s21, 0
      %p90 = por %p88, %p89
      %s92 = sadd.s32 %s91, 1
      %p95 = scmp.eq.s32.totalorder %s15, 1
      %p96 = scmp.ne.s32.totalorder %s91, %s93
      %p97 = scmp.eq.s32.totalorder %s15, 0
      %p98 = por %p96, %p97
      %p99 = scmp.ne.s32.totalorder %s91, %s93
      %p100 = scmp.eq.s32.totalorder %s20, 1
      %p101 = por %p99, %p100
      %p102 = scmp.ne.s32.totalorder %s93, %s94
      %p103 = scmp.eq.s32.totalorder %s20, 0
      %p104 = por %p102, %p103
      %p105 = scmp.ne.s32.totalorder %s93, %s94
      %p106 = scmp.eq.s32.totalorder %s21, 1
      %p107 = por %p105, %p106
      %p109 = scmp.ne.s32.totalorder %s94, %s108
      %p110 = scmp.eq.s32.totalorder %s21, 0
      %p111 = por %p109, %p110
      %s113 = sadd.s32 %s112, 1
      %p116 = scmp.eq.s32.totalorder %s15, 1
      %p117 = scmp.ne.s32.totalorder %s112, %s114
      %p118 = scmp.eq.s32.totalorder %s15, 0
      %p119 = por %p117, %p118
      %p120 = scmp.ne.s32.totalorder %s112, %s114
      %p121 = scmp.eq.s32.totalorder %s20, 1
      %p122 = por %p120, %p121
      %p123 = scmp.ne.s32.totalorder %s114, %s115
      %p124 = scmp.eq.s32.totalorder %s20, 0
      %p125 = por %p123, %p124
      %p126 = scmp.ne.s32.totalorder %s114, %s115
      %p127 = scmp.eq.s32.totalorder %s21, 1
      %p128 = por %p126, %p127
      %p130 = scmp.ne.s32.totalorder %s115, %s129
      %p131 = scmp.eq.s32.totalorder %s21, 0
      %p132 = por %p130, %p131
      %s134 = sadd.s32 %s133, 1
      %p137 = scmp.eq.s32.totalorder %s15, 1
      %p138 = scmp.ne.s32.totalorder %s133, %s135
      %p139 = scmp.eq.s32.totalorder %s15, 0
      %p140 = por %p138, %p139
      %p141 = scmp.ne.s32.totalorder %s133, %s135
      %p142 = scmp.eq.s32.totalorder %s20, 1
      %p143 = por %p141, %p142
      %p144 = scmp.ne.s32.totalorder %s135, %s136
      %p145 = scmp.eq.s32.totalorder %s20, 0
      %p146 = por %p144, %p145
      %p147 = scmp.ne.s32.totalorder %s135, %s136
      %p148 = scmp.eq.s32.totalorder %s21, 1
      %p149 = por %p147, %p148
      %p151 = scmp.ne.s32.totalorder %s136, %s150
      %p152 = scmp.eq.s32.totalorder %s21, 0
      %p153 = por %p151, %p152
      %s155 = sadd.s32 %s154, 1
      %p158 = scmp.eq.s32.totalorder %s15, 1
      %p159 = scmp.ne.s32.totalorder %s154, %s156
      %p160 = scmp.eq.s32.totalorder %s15, 0
      %p161 = por %p159, %p160
      %p162 = scmp.ne.s32.totalorder %s154, %s156
      %p163 = scmp.eq.s32.totalorder %s20, 1
      %p164 = por %p162, %p163
      %p165 = scmp.ne.s32.totalorder %s156, %s157
      %p166 = scmp.eq.s32.totalorder %s20, 0
      %p167 = por %p165, %p166
      %p168 = scmp.ne.s32.totalorder %s156, %s157
      %p169 = scmp.eq.s32.totalorder %s21, 1
      %p170 = por %p168, %p169
      %p172 = scmp.ne.s32.totalorder %s157, %s171
      %p173 = scmp.eq.s32.totalorder %s21, 0
      %p174 = por %p172, %p173
      %s175 = ssub.s32 %s15, %s22
      %p176 = scmp.eq.s32.totalorder %s175, 0
      %s178 = sadd.s32 %s177, 1
      %s179 = scalar_select %p176, %s177, %s178
      %p182 = pneg %p176
      %p183 = scmp.eq.s32.totalorder %s15, 1
      %p184 = por %p182, %p183
      %p185 = scmp.ne.s32.totalorder %s177, %s180
      %p186 = scmp.eq.s32.totalorder %s15, 0
      %p187 = por %p185, %p186
      %p188 = scmp.ne.s32.totalorder %s177, %s180
      %p189 = scmp.eq.s32.totalorder %s20, 1
      %p190 = por %p188, %p189
      %p191 = scmp.ne.s32.totalorder %s180, %s181
      %p192 = scmp.eq.s32.totalorder %s20, 0
      %p193 = por %p191, %p192
      %p194 = scmp.ne.s32.totalorder %s180, %s181
      %p195 = scmp.eq.s32.totalorder %s21, 1
      %p196 = por %p194, %p195
      %p198 = scmp.ne.s32.totalorder %s181, %s197
      %p199 = scmp.eq.s32.totalorder %s21, 0
      %p200 = por %p198, %p199
      %p201 = scmp.le.s32.totalorder 1, %s15
      %p202 = scmp.lt.s32.totalorder %s15, 3
      %p203 = pnand %p201, %p202
      %p204 = pneg %p203
      // Predicated region
      $region9: #{custom_mlp_forward.1} parent=5 // pred_check
        _
      $region10: #{custom_mlp_forward.1} parent=5 // pred_check_branch
        %206 = sbr.rel (%p203) target = $region12
      $region11: #{custom_mlp_forward.1} parent=5 // pred_region
        %s207 = ssub.s32 %s15, 1
        // Predicated region
        $region13: #{custom_mlp_forward.1} parent=11 // pred_check
          %p208 = pneg %p62
        $region14: #{custom_mlp_forward.1} parent=11 // pred_check_branch
          %210 = sbr.rel (%p208) target = $region16
        $region15: #{custom_mlp_forward.1} parent=11 // pred_region
          %s212 = ssub.s32 1024, 1024
          %213 = vsyncadd [#allocation3], %s212
          %s214 = sshll.u32 [#allocation2], 4
          %s215 = int_to_ptr.vmem [resolvable:$true] %s214
          %220 = dma.hbm_to_vmem [thread:$0]  %s1, 1024, %s215, [#allocation3], 64, 64, 4
        $region16: #{custom_mlp_forward.1} parent=11 // pred_fallthru
          _
        // Predicated region
        $region17: #{custom_mlp_forward.1} parent=11 // pred_check
          %p221 = pneg %p83
        $region18: #{custom_mlp_forward.1} parent=11 // pred_check_branch
          %223 = sbr.rel (%p221) target = $region20
        $region19: #{custom_mlp_forward.1} parent=11 // pred_region
          _
        $region20: #{custom_mlp_forward.1} parent=11 // pred_fallthru
          _
        // Predicated region
        $region21: #{custom_mlp_forward.1} parent=11 // pred_check
          %p224 = pneg %p104
        $region22: #{custom_mlp_forward.1} parent=11 // pred_check_branch
          %226 = sbr.rel (%p224) target = $region24
        $region23: #{custom_mlp_forward.1} parent=11 // pred_region
          _
        $region24: #{custom_mlp_forward.1} parent=11 // pred_fallthru
          _
        // Predicated region
        $region25: #{custom_mlp_forward.1} parent=11 // pred_check
          %p227 = pneg %p125
        $region26: #{custom_mlp_forward.1} parent=11 // pred_check_branch
          %229 = sbr.rel (%p227) target = $region28
        $region27: #{custom_mlp_forward.1} parent=11 // pred_region
          _
        $region28: #{custom_mlp_forward.1} parent=11 // pred_fallthru
          _
        // Predicated region
        $region29: #{custom_mlp_forward.1} parent=11 // pred_check
          %p230 = pneg %p146
        $region30: #{custom_mlp_forward.1} parent=11 // pred_check_branch
          %232 = sbr.rel (%p230) target = $region32
        $region31: #{custom_mlp_forward.1} parent=11 // pred_region
          %s234 = ssub.s32 1024, 1024
          %235 = vsyncadd [#allocation5], %s234
          %s236 = sshll.u32 [#allocation4], 4
          %s237 = int_to_ptr.vmem [resolvable:$true] %s236
          %242 = dma.hbm_to_vmem [thread:$0]  %s5, 1024, %s237, [#allocation5], 64, 64, 4
        $region32: #{custom_mlp_forward.1} parent=11 // pred_fallthru
          _
        // Predicated region
        $region33: #{custom_mlp_forward.1} parent=11 // pred_check
          %p243 = pneg %p167
        $region34: #{custom_mlp_forward.1} parent=11 // pred_check_branch
          %245 = sbr.rel (%p243) target = $region36
        $region35: #{custom_mlp_forward.1} parent=11 // pred_region
          _
        $region36: #{custom_mlp_forward.1} parent=11 // pred_fallthru
          _
      $region12: #{custom_mlp_forward.1} parent=5 // pred_fallthru
        _
      %p246 = scmp.lt.s32.totalorder %s15, 2
      // Predicated region
      $region37: #{custom_mlp_forward.1} parent=5 // pred_check
        %p247 = pneg %p246
      $region38: #{custom_mlp_forward.1} parent=5 // pred_check_branch
        %249 = sbr.rel (%p247) target = $region40
      $region39: #{custom_mlp_forward.1} parent=5 // pred_region
        // Predicated region
        $region41: #{custom_mlp_forward.1} parent=39 // pred_check
          %p250 = pneg %p35
        $region42: #{custom_mlp_forward.1} parent=39 // pred_check_branch
          %252 = sbr.rel (%p250) target = $region44
        $region43: #{custom_mlp_forward.1} parent=39 // pred_region
          %s253 = smul.u32 2, %s15
          %p254 = scmp.lt.s32.totalorder %s253, 3
          %s255 = scalar_select %p254, %s253, 3
          %s256 = smul.addr %s255, 8
          %s257 = scalar_lea.vmem %s0, %s256
          %s258 = smul.u32 2, %s15
        $region44: #{custom_mlp_forward.1} parent=39 // pred_fallthru
          _
      $region40: #{custom_mlp_forward.1} parent=5 // pred_fallthru
        _
      %p259 = scmp.le.s32.totalorder 1, %s15
      %p260 = scmp.lt.s32.totalorder %s15, 3
      %p261 = pnand %p259, %p260
      %p262 = pneg %p261
      // Predicated region
      $region45: #{custom_mlp_forward.1} parent=5 // pred_check
        _
      $region46: #{custom_mlp_forward.1} parent=5 // pred_check_branch
        %264 = sbr.rel (%p261) target = $region48
      $region47: #{custom_mlp_forward.1} parent=5 // pred_region
        %s265 = ssub.s32 %s15, 1
        // Predicated region
        $region49: #{custom_mlp_forward.1} parent=47 // pred_check
          %p266 = pneg %p62
        $region50: #{custom_mlp_forward.1} parent=47 // pred_check_branch
          %268 = sbr.rel (%p266) target = $region52
        $region51: #{custom_mlp_forward.1} parent=47 // pred_region
          %269 = dma.done [#allocation3], 1024
        $region52: #{custom_mlp_forward.1} parent=47 // pred_fallthru
          _
        // Predicated region
        $region53: #{custom_mlp_forward.1} parent=47 // pred_check
          %p270 = pneg %p146
        $region54: #{custom_mlp_forward.1} parent=47 // pred_check_branch
          %272 = sbr.rel (%p270) target = $region56
        $region55: #{custom_mlp_forward.1} parent=47 // pred_region
          %273 = dma.done [#allocation5], 1024
        $region56: #{custom_mlp_forward.1} parent=47 // pred_fallthru
          _
        %s274 = smul.u32 2, %s20
        %p275 = scmp.lt.s32.totalorder %s274, 3
        %s276 = scalar_select %p275, %s274, 3
        %s277 = smul.addr %s276, 8
        %s278 = scalar_lea.vmem %s0, %s277
        %p279 = pneg %p41
        %p280 = pneg %p38
        %p281 = pneg %p62
        %p282 = pneg %p59
        %p283 = pneg %p83
        %p284 = pneg %p80
        %p285 = pneg %p104
        %p286 = pneg %p101
        %p287 = pneg %p125
        %p288 = pneg %p122
        %p289 = pneg %p146
        %p290 = pneg %p143
        %p291 = pneg %p167
        %p292 = pneg %p164
        %p293 = pneg %p193
        %p294 = pneg %p190
        %s295 = smul.u32 2, %s20
        %p296 = scmp.lt.s32.totalorder %s295, 3
        %s297 = scalar_select %p296, %s295, 3
        %s298 = smul.addr %s297, 8
        %s299 = scalar_lea.vmem %s7, %s298
        %s300 = smul.u32 2, %s20
        %p301 = scmp.lt.s32.totalorder %s300, 3
        %s302 = scalar_select %p301, %s300, 3
        %s303 = smul.addr %s302, 8
        %s304 = scalar_lea.vmem %s0, %s303
        %s305 = smul.u32 2, %s20
        %s306 = smul.u32 2, %s20
        %p307 = scmp.lt.s32.totalorder %s306, 3
        %s308 = scalar_select %p307, %s306, 3
        %s309 = smul.addr %s308, 8
        %s310 = scalar_lea.vmem %s7, %s309
        %s311 = smul.u32 2, %s20
        %v313 = vld [vmem:[%s304] sm:$0xff]
        %v314 = vld [vmem:[%s304 + $0x8] sm:$0xff]
        %v315 = vld [vmem:[#allocation2] sm:$0xf]
        %v316 = vld [vmem:[#allocation2 + $0x4] sm:$0xf]
        %v317 = vld [vmem:[#allocation2 + $0x8] sm:$0xf]
        %v318 = vld [vmem:[#allocation2 + $0xc] sm:$0xf]
        %v319 = vld [vmem:[#allocation2 + $0x10] sm:$0xf]
        %v320 = vld [vmem:[#allocation2 + $0x14] sm:$0xf]
        %v321 = vld [vmem:[#allocation2 + $0x18] sm:$0xf]
        %v322 = vld [vmem:[#allocation2 + $0x1c] sm:$0xf]
        %v323 = vld [vmem:[#allocation2 + $0x20] sm:$0xf]
        %v324 = vld [vmem:[#allocation2 + $0x24] sm:$0xf]
        %v325 = vld [vmem:[#allocation2 + $0x28] sm:$0xf]
        %v326 = vld [vmem:[#allocation2 + $0x2c] sm:$0xf]
        %v327 = vld [vmem:[#allocation2 + $0x30] sm:$0xf]
        %v328 = vld [vmem:[#allocation2 + $0x34] sm:$0xf]
        %v329 = vld [vmem:[#allocation2 + $0x38] sm:$0xf]
        %v330 = vld [vmem:[#allocation2 + $0x3c] sm:$0xf]
        %v331 = vld [vmem:[%s2] sm:$0x1]
        %v332 = vpack.c.bf16 %v314, %v313
        %v334 = vlaneseq
        %v335 = vshrl.u32 %v334, 7
        %v336 = vsub.s32 0, %v335
        %v337 = vrot.slane %v331, %v336
        %v355 = vunpack.c.l.b16 %v315
        %v356 = vunpack.c.l.b16 %v316
        %v357 = vunpack.c.l.b16 %v317
        %v358 = vunpack.c.l.b16 %v318
        %v359 = vunpack.c.l.b16 %v319
        %v360 = vunpack.c.l.b16 %v320
        %v361 = vunpack.c.l.b16 %v321
        %v362 = vunpack.c.l.b16 %v322
        %v363 = vunpack.c.l.b16 %v323
        %v364 = vunpack.c.l.b16 %v324
        %v365 = vunpack.c.l.b16 %v325
        %v366 = vunpack.c.l.b16 %v326
        %v367 = vunpack.c.l.b16 %v327
        %v368 = vunpack.c.l.b16 %v328
        %v369 = vunpack.c.l.b16 %v329
        %v370 = vunpack.c.l.b16 %v330
        %v371 = vpack.c.b16 %v356, %v355
        %v372 = vpack.c.b16 %v358, %v357
        %v373 = vpack.c.b16 %v360, %v359
        %v374 = vpack.c.b16 %v362, %v361
        %v375 = vpack.c.b16 %v364, %v363
        %v376 = vpack.c.b16 %v366, %v365
        %v377 = vpack.c.b16 %v368, %v367
        %v378 = vpack.c.b16 %v370, %v369
        %387 = vmatprep.subr.bf16.mxu0 0
        %388 = vmatpush1.bf16.msra.mxu0 %v371
        %389 = vmatprep.subr.bf16.mxu0 0
        %390 = vmatpush1.bf16.msra.mxu0 %v372
        %391 = vmatprep.subr.bf16.mxu0 0
        %392 = vmatpush1.bf16.msra.mxu0 %v373
        %393 = vmatprep.subr.bf16.mxu0 0
        %394 = vmatpush1.bf16.msra.mxu0 %v374
        %395 = vmatprep.subr.bf16.mxu0 0
        %396 = vmatpush1.bf16.msra.mxu0 %v375
        %397 = vmatprep.subr.bf16.mxu0 0
        %398 = vmatpush1.bf16.msra.mxu0 %v376
        %399 = vmatprep.subr.bf16.mxu0 0
        %400 = vmatpush1.bf16.msra.mxu0 %v377
        %401 = vmatprep.subr.bf16.mxu0 0
        %402 = vmatpush1.bf16.msra.mxu0 %v378
        %403 = vmatprep.subr.bf16.mxu0 0
        %404 = vmatpush1.bf16.msra.mxu0 0
        %405 = vmatprep.subr.bf16.mxu0 0
        %406 = vmatpush1.bf16.msra.mxu0 0
        %407 = vmatprep.subr.bf16.mxu0 0
        %408 = vmatpush1.bf16.msra.mxu0 0
        %409 = vmatprep.subr.bf16.mxu0 0
        %410 = vmatpush1.bf16.msra.mxu0 0
        %411 = vmatprep.subr.bf16.mxu0 0
        %412 = vmatpush1.bf16.msra.mxu0 0
        %413 = vmatprep.subr.bf16.mxu0 0
        %414 = vmatpush1.bf16.msra.mxu0 0
        %415 = vmatprep.subr.bf16.mxu0 0
        %416 = vmatpush1.bf16.msra.mxu0 0
        %417 = vmatprep.subr.bf16.mxu0 0
        %418 = vmatpush1.bf16.msra.mxu0 0
        %419 = vmatprep.mubr.bf16.mxu0 0
        %420 = vmatmul.mubr.bf16.gmra.mrb[0].mxu0 %v332
        %v421 = vpop.f32.mrb[0].mxu0
        %v422 = vadd.f32 %v337, %v421
        %v423 = vpop.f32.mrb[0].mxu0
        %v424 = vpop.f32.mrb[0].mxu0
        %v425 = vadd.f32 %v337, %v424
        %v426 = vpop.f32.mrb[0].mxu0
        %427 = vdwg.mxu0
        %v428 = vmax.f32 %v422, 0.0
        %v429 = vmax.f32 %v425, 0.0
        %v430 = vld [vmem:[%s3] sm:$0xf]
        %v431 = vld [vmem:[%s3 + $0x4] sm:$0xf]
        %v432 = vld [vmem:[%s3 + $0x8] sm:$0xf]
        %v433 = vld [vmem:[%s3 + $0xc] sm:$0xf]
        %v434 = vld [vmem:[%s3 + $0x10] sm:$0xf]
        %v435 = vld [vmem:[%s3 + $0x14] sm:$0xf]
        %v436 = vld [vmem:[%s3 + $0x18] sm:$0xf]
        %v437 = vld [vmem:[%s3 + $0x1c] sm:$0xf]
        %v438 = vld [vmem:[%s3 + $0x20] sm:$0xf]
        %v439 = vld [vmem:[%s3 + $0x24] sm:$0xf]
        %v440 = vld [vmem:[%s3 + $0x28] sm:$0xf]
        %v441 = vld [vmem:[%s3 + $0x2c] sm:$0xf]
        %v442 = vld [vmem:[%s3 + $0x30] sm:$0xf]
        %v443 = vld [vmem:[%s3 + $0x34] sm:$0xf]
        %v444 = vld [vmem:[%s3 + $0x38] sm:$0xf]
        %v445 = vld [vmem:[%s3 + $0x3c] sm:$0xf]
        %v446 = vld [vmem:[%s4] sm:$0x1]
        %v447 = vpack.c.bf16 %v429, %v428
        %v449 = vlaneseq
        %v450 = vshrl.u32 %v449, 7
        %v451 = vsub.s32 0, %v450
        %v452 = vrot.slane %v446, %v451
        %v470 = vunpack.c.l.b16 %v430
        %v471 = vunpack.c.l.b16 %v431
        %v472 = vunpack.c.l.b16 %v432
        %v473 = vunpack.c.l.b16 %v433
        %v474 = vunpack.c.l.b16 %v434
        %v475 = vunpack.c.l.b16 %v435
        %v476 = vunpack.c.l.b16 %v436
        %v477 = vunpack.c.l.b16 %v437
        %v478 = vunpack.c.l.b16 %v438
        %v479 = vunpack.c.l.b16 %v439
        %v480 = vunpack.c.l.b16 %v440
        %v481 = vunpack.c.l.b16 %v441
        %v482 = vunpack.c.l.b16 %v442
        %v483 = vunpack.c.l.b16 %v443
        %v484 = vunpack.c.l.b16 %v444
        %v485 = vunpack.c.l.b16 %v445
        %v486 = vpack.c.b16 %v471, %v470
        %v487 = vpack.c.b16 %v473, %v472
        %v488 = vpack.c.b16 %v475, %v474
        %v489 = vpack.c.b16 %v477, %v476
        %v490 = vpack.c.b16 %v479, %v478
        %v491 = vpack.c.b16 %v481, %v480
        %v492 = vpack.c.b16 %v483, %v482
        %v493 = vpack.c.b16 %v485, %v484
        %502 = vmatprep.subr.bf16.mxu0 0
        %503 = vmatpush1.bf16.msra.mxu0 %v486
        %504 = vmatprep.subr.bf16.mxu0 0
        %505 = vmatpush1.bf16.msra.mxu0 %v487
        %506 = vmatprep.subr.bf16.mxu0 0
        %507 = vmatpush1.bf16.msra.mxu0 %v488
        %508 = vmatprep.subr.bf16.mxu0 0
        %509 = vmatpush1.bf16.msra.mxu0 %v489
        %510 = vmatprep.subr.bf16.mxu0 0
        %511 = vmatpush1.bf16.msra.mxu0 %v490
        %512 = vmatprep.subr.bf16.mxu0 0
        %513 = vmatpush1.bf16.msra.mxu0 %v491
        %514 = vmatprep.subr.bf16.mxu0 0
        %515 = vmatpush1.bf16.msra.mxu0 %v492
        %516 = vmatprep.subr.bf16.mxu0 0
        %517 = vmatpush1.bf16.msra.mxu0 %v493
        %518 = vmatprep.subr.bf16.mxu0 0
        %519 = vmatpush1.bf16.msra.mxu0 0
        %520 = vmatprep.subr.bf16.mxu0 0
        %521 = vmatpush1.bf16.msra.mxu0 0
        %522 = vmatprep.subr.bf16.mxu0 0
        %523 = vmatpush1.bf16.msra.mxu0 0
        %524 = vmatprep.subr.bf16.mxu0 0
        %525 = vmatpush1.bf16.msra.mxu0 0
        %526 = vmatprep.subr.bf16.mxu0 0
        %527 = vmatpush1.bf16.msra.mxu0 0
        %528 = vmatprep.subr.bf16.mxu0 0
        %529 = vmatpush1.bf16.msra.mxu0 0
        %530 = vmatprep.subr.bf16.mxu0 0
        %531 = vmatpush1.bf16.msra.mxu0 0
        %532 = vmatprep.subr.bf16.mxu0 0
        %533 = vmatpush1.bf16.msra.mxu0 0
        %534 = vmatprep.mubr.bf16.mxu0 0
        %535 = vmatmul.mubr.bf16.gmra.mrb[0].mxu0 %v447
        %v536 = vpop.f32.mrb[0].mxu0
        %v537 = vadd.f32 %v452, %v536
        %v538 = vpop.f32.mrb[0].mxu0
        %v539 = vpop.f32.mrb[0].mxu0
        %v540 = vadd.f32 %v452, %v539
        %v541 = vpop.f32.mrb[0].mxu0
        %542 = vdwg.mxu0
        %v543 = vmax.f32 %v537, 0.0
        %v544 = vmax.f32 %v540, 0.0
        %v545 = vld [vmem:[#allocation4] sm:$0xf]
        %v546 = vld [vmem:[#allocation4 + $0x4] sm:$0xf]
        %v547 = vld [vmem:[#allocation4 + $0x8] sm:$0xf]
        %v548 = vld [vmem:[#allocation4 + $0xc] sm:$0xf]
        %v549 = vld [vmem:[#allocation4 + $0x10] sm:$0xf]
        %v550 = vld [vmem:[#allocation4 + $0x14] sm:$0xf]
        %v551 = vld [vmem:[#allocation4 + $0x18] sm:$0xf]
        %v552 = vld [vmem:[#allocation4 + $0x1c] sm:$0xf]
        %v553 = vld [vmem:[#allocation4 + $0x20] sm:$0xf]
        %v554 = vld [vmem:[#allocation4 + $0x24] sm:$0xf]
        %v555 = vld [vmem:[#allocation4 + $0x28] sm:$0xf]
        %v556 = vld [vmem:[#allocation4 + $0x2c] sm:$0xf]
        %v557 = vld [vmem:[#allocation4 + $0x30] sm:$0xf]
        %v558 = vld [vmem:[#allocation4 + $0x34] sm:$0xf]
        %v559 = vld [vmem:[#allocation4 + $0x38] sm:$0xf]
        %v560 = vld [vmem:[#allocation4 + $0x3c] sm:$0xf]
        %v561 = vld [vmem:[%s6] sm:$0x1]
        %v562 = vpack.c.bf16 %v544, %v543
        %v564 = vlaneseq
        %v565 = vshrl.u32 %v564, 7
        %v566 = vsub.s32 0, %v565
        %v567 = vrot.slane %v561, %v566
        %v585 = vunpack.c.l.b16 %v545
        %v586 = vunpack.c.l.b16 %v546
        %v587 = vunpack.c.l.b16 %v547
        %v588 = vunpack.c.l.b16 %v548
        %v589 = vunpack.c.l.b16 %v549
        %v590 = vunpack.c.l.b16 %v550
        %v591 = vunpack.c.l.b16 %v551
        %v592 = vunpack.c.l.b16 %v552
        %v593 = vunpack.c.l.b16 %v553
        %v594 = vunpack.c.l.b16 %v554
        %v595 = vunpack.c.l.b16 %v555
        %v596 = vunpack.c.l.b16 %v556
        %v597 = vunpack.c.l.b16 %v557
        %v598 = vunpack.c.l.b16 %v558
        %v599 = vunpack.c.l.b16 %v559
        %v600 = vunpack.c.l.b16 %v560
        %v601 = vpack.c.b16 %v586, %v585
        %v602 = vpack.c.b16 %v588, %v587
        %v603 = vpack.c.b16 %v590, %v589
        %v604 = vpack.c.b16 %v592, %v591
        %v605 = vpack.c.b16 %v594, %v593
        %v606 = vpack.c.b16 %v596, %v595
        %v607 = vpack.c.b16 %v598, %v597
        %v608 = vpack.c.b16 %v600, %v599
        %617 = vmatprep.subr.bf16.mxu0 0
        %618 = vmatpush1.bf16.msra.mxu0 %v601
        %619 = vmatprep.subr.bf16.mxu0 0
        %620 = vmatpush1.bf16.msra.mxu0 %v602
        %621 = vmatprep.subr.bf16.mxu0 0
        %622 = vmatpush1.bf16.msra.mxu0 %v603
        %623 = vmatprep.subr.bf16.mxu0 0
        %624 = vmatpush1.bf16.msra.mxu0 %v604
        %625 = vmatprep.subr.bf16.mxu0 0
        %626 = vmatpush1.bf16.msra.mxu0 %v605
        %627 = vmatprep.subr.bf16.mxu0 0
        %628 = vmatpush1.bf16.msra.mxu0 %v606
        %629 = vmatprep.subr.bf16.mxu0 0
        %630 = vmatpush1.bf16.msra.mxu0 %v607
        %631 = vmatprep.subr.bf16.mxu0 0
        %632 = vmatpush1.bf16.msra.mxu0 %v608
        %633 = vmatprep.subr.bf16.mxu0 0
        %634 = vmatpush1.bf16.msra.mxu0 0
        %635 = vmatprep.subr.bf16.mxu0 0
        %636 = vmatpush1.bf16.msra.mxu0 0
        %637 = vmatprep.subr.bf16.mxu0 0
        %638 = vmatpush1.bf16.msra.mxu0 0
        %639 = vmatprep.subr.bf16.mxu0 0
        %640 = vmatpush1.bf16.msra.mxu0 0
        %641 = vmatprep.subr.bf16.mxu0 0
        %642 = vmatpush1.bf16.msra.mxu0 0
        %643 = vmatprep.subr.bf16.mxu0 0
        %644 = vmatpush1.bf16.msra.mxu0 0
        %645 = vmatprep.subr.bf16.mxu0 0
        %646 = vmatpush1.bf16.msra.mxu0 0
        %647 = vmatprep.subr.bf16.mxu0 0
        %648 = vmatpush1.bf16.msra.mxu0 0
        %649 = vmatprep.mubr.bf16.mxu0 0
        %650 = vmatmul.mubr.bf16.gmra.mrb[0].mxu0 %v562
        %v651 = vpop.f32.mrb[0].mxu0
        %v652 = vadd.f32 %v567, %v651
        %v653 = vpop.f32.mrb[0].mxu0
        %v654 = vpop.f32.mrb[0].mxu0
        %v655 = vadd.f32 %v567, %v654
        %v656 = vpop.f32.mrb[0].mxu0
        %657 = vdwg.mxu0
        %658 = vst [vmem:[%s310] sm:$0xff] %v652
        %659 = vst [vmem:[%s310 + $0x8] sm:$0xff] %v655
        %s660 = smul.u32 2, %s20
        %p661 = scmp.lt.s32.totalorder %s660, 3
        %s662 = scalar_select %p661, %s660, 3
        %s663 = smul.addr %s662, 8
        %s664 = scalar_lea.vmem %s7, %s663
        // Predicated region
        $region57: #{custom_mlp_forward.1} parent=47 // pred_check
          %p665 = pneg %p190
        $region58: #{custom_mlp_forward.1} parent=47 // pred_check_branch
          %667 = sbr.rel (%p665) target = $region60
        $region59: #{custom_mlp_forward.1} parent=47 // pred_region
          %s668 = smul.u32 2, %s20
        $region60: #{custom_mlp_forward.1} parent=47 // pred_fallthru
          _
      $region48: #{custom_mlp_forward.1} parent=5 // pred_fallthru
        _
      %p669 = scmp.le.s32.totalorder 2, %s15
      // Predicated region
      $region61: #{custom_mlp_forward.1} parent=5 // pred_check
        %p670 = pneg %p669
      $region62: #{custom_mlp_forward.1} parent=5 // pred_check_branch
        %672 = sbr.rel (%p670) target = $region64
      $region63: #{custom_mlp_forward.1} parent=5 // pred_region
        %s673 = ssub.s32 %s15, 2
        // Predicated region
        $region65: #{custom_mlp_forward.1} parent=63 // pred_check
          %p674 = pneg %p196
        $region66: #{custom_mlp_forward.1} parent=63 // pred_check_branch
          %676 = sbr.rel (%p674) target = $region68
        $region67: #{custom_mlp_forward.1} parent=63 // pred_region
          %s677 = smul.u32 2, %s21
          %p678 = scmp.lt.s32.totalorder %s677, 3
          %s679 = scalar_select %p678, %s677, 3
          %s680 = smul.addr %s679, 8
          %s681 = scalar_lea.vmem %s7, %s680
        $region68: #{custom_mlp_forward.1} parent=63 // pred_fallthru
          _
      $region64: #{custom_mlp_forward.1} parent=5 // pred_fallthru
        _
    $region6: #{custom_mlp_forward.1} parent=1 // loop_footer
      %s19 = sadd.s32 1, %s15
    $region7: #{custom_mlp_forward.1} parent=1 // loop_footer_branch
      %14 = sbr.rel target = $region3
    $region8: #{custom_mlp_forward.1} parent=1 // loop_exit
      _
    %682 = vsyncpa [#allocation3], 1
    %s683 = scalar_lea.sflag [#allocation3], 1
    %684 = vsyncpa %s683, 1
    %685 = vsyncpa [#allocation5], 1

</llo_original>
